<compile_context>
chip_gen: v6e
topology: v6e:2x2x1
jax: 0.10.0
libtpu: 0.0.40
codegen_flags: <defaults>
</compile_context>

<pallas_src>
import math
import functools

import jax
import jax.numpy as jnp
from jax import lax
from jax.experimental import pallas as pl
from jax.experimental.pallas import tpu as pltpu


def _embedding_gather_kernel(ids_ref, lut_hbm, out_ref, buf_ref, sem_ref, *, scale):
    """One grid step: DMA-gather a (T, D) tile of LUT rows, scale, store.

    ids_ref : SMEM (n_pad,) int32     -- full flat token-id array (scalar prefetch)
    lut_hbm : HBM  (vocab, D)         -- embedding table, never copied wholesale
    out_ref : VMEM (T, D)             -- output tile (lane-dense over full D)
    buf_ref : VMEM (T, D)             -- gather landing buffer
    sem_ref : DMA semaphores, shape (2,) -- one per half-tile for overlap
    """
    i = pl.program_id(0)
    T, _ = out_ref.shape
    half = T // 2
    base = i * T

    def issue_half(h):
        def body(r, carry):
            row = h * half + r
            tok = ids_ref[base + row]
            pltpu.make_async_copy(
                lut_hbm.at[pl.ds(tok, 1), :],
                buf_ref.at[pl.ds(row, 1), :],
                sem_ref.at[h],
            ).start()
            return carry
        lax.fori_loop(0, half, body, 0)

    def wait_half(h):
        # Each wait retires one row-sized copy on this half's semaphore.
        def body(r, carry):
            pltpu.make_async_copy(
                lut_hbm.at[pl.ds(0, 1), :],
                buf_ref.at[pl.ds(0, 1), :],
                sem_ref.at[h],
            ).wait()
            return carry
        lax.fori_loop(0, half, body, 0)

    # Queue the whole tile up front, then retire + store half-by-half so the
    # second half's HBM transfers overlap the first half's scale + store.
    issue_half(0)
    issue_half(1)

    wait_half(0)
    out_ref[pl.ds(0, half), :] = (
        buf_ref[pl.ds(0, half), :] * scale).astype(out_ref.dtype)

    wait_half(1)
    out_ref[pl.ds(half, half), :] = (
        buf_ref[pl.ds(half, half), :] * scale).astype(out_ref.dtype)


def _round_up(x, m):
    return ((x + m - 1) // m) * m


def embeddings_forward(ids, lut, *, tile_tokens=512):
    """ids: (B, S) int, lut: (vocab, d_model) -> (B, S, d_model) = lut[ids] * sqrt(d_model)."""
    B, S = ids.shape
    vocab, d_model = lut.shape
    n_tok = B * S
    itemsize = jnp.dtype(lut.dtype).itemsize
    per_row_bytes = d_model * itemsize

    # Per-generation VMEM budget (gather buffer + double-buffered out tile must
    # fit with headroom). The LUT stays in HBM so it never enters this budget.
    try:
        vmem_cap = pltpu.get_tpu_info().vmem_capacity_bytes
    except Exception:
        vmem_cap = 64 * 1024 * 1024  # conservative (v7x per-TC size)
    budget = int(0.6 * vmem_cap)

    # Token tile: multiple of 16 (each half-tile sublane aligned), capped by
    # tile_tokens and by the per-generation VMEM budget.
    T = _round_up(min(tile_tokens, max(n_tok, 16)), 16)
    while T > 16 and 3 * T * per_row_bytes > budget:
        T -= 16

    n_pad = _round_up(n_tok, T)
    n_tiles = n_pad // T

    flat_ids = ids.reshape(-1).astype(jnp.int32)
    if n_pad != n_tok:
        # Pad with id 0 (a valid row) so padded-row DMAs never go out of bounds.
        flat_ids = jnp.concatenate(
            [flat_ids, jnp.zeros((n_pad - n_tok,), jnp.int32)])

    scale = float(math.sqrt(d_model))  # Python float -> literal, not captured const

    need = 3 * T * per_row_bytes + (2 << 20)
    vmem_limit = int(min(vmem_cap - (8 << 20), max(need, 32 << 20)))

    grid_spec = pltpu.PrefetchScalarGridSpec(
        num_scalar_prefetch=1,                 # ids -> SMEM, cheap scalar reads
        grid=(n_tiles,),
        in_specs=[pl.BlockSpec(memory_space=pl.ANY)],   # LUT stays in HBM
        out_specs=pl.BlockSpec((T, d_model), lambda i, ids_smem: (i, 0)),
        scratch_shapes=[
            pltpu.VMEM((T, d_model), lut.dtype),        # gather landing buffer
            pltpu.SemaphoreType.DMA((2,)),              # one sem per half-tile
        ],
    )

    out = pl.pallas_call(
        functools.partial(_embedding_gather_kernel, scale=scale),
        out_shape=jax.ShapeDtypeStruct((n_pad, d_model), lut.dtype),
        grid_spec=grid_spec,
        compiler_params=pltpu.CompilerParams(
            dimension_semantics=("parallel",),
            vmem_limit_bytes=vmem_limit),
    )(flat_ids, lut)

    return out[:n_tok].reshape(B, S, d_model)


if __name__ == "__main__":
    key = jax.random.PRNGKey(0)
    k_lut, k_ids, k_lut2, k_ids2 = jax.random.split(key, 4)

    # Small shapes consistent with the module: (B, S) token ids, (vocab, d_model) table.
    vocab, d_model = 64, 128
    B, S = 2, 8
    lut = jax.random.normal(k_lut, (vocab, d_model), dtype=jnp.float32)
    ids = jax.random.randint(k_ids, (B, S), 0, vocab, dtype=jnp.int32)

    out = jax.block_until_ready(embeddings_forward(ids, lut))
    ref = jnp.take(lut, ids, axis=0) * jnp.float32(math.sqrt(d_model))
    assert out.shape == (B, S, d_model)
    assert jnp.allclose(out, ref, atol=1e-5, rtol=1e-5), float(
        jnp.max(jnp.abs(out - ref)))

    # Second check: multiple token tiles + tail padding path.
    vocab2, d_model2 = 1000, 128
    B2, S2 = 4, 200
    lut2 = jax.random.normal(k_lut2, (vocab2, d_model2), dtype=jnp.float32)
    ids2 = jax.random.randint(k_ids2, (B2, S2), 0, vocab2, dtype=jnp.int32)
    out2 = jax.block_until_ready(embeddings_forward(ids2, lut2))
    ref2 = jnp.take(lut2, ids2, axis=0) * jnp.float32(math.sqrt(d_model2))
    assert out2.shape == (B2, S2, d_model2)
    assert jnp.allclose(out2, ref2, atol=1e-5, rtol=1e-5), float(
        jnp.max(jnp.abs(out2 - ref2)))

    print("KERNEL_OK")
</pallas_src>

<mosaic_0001>
module attributes {stable_mosaic.version = 11 : i64} {
  func.func @_embedding_gather_kernel(%arg0: i32, %arg1: memref<16xi32, #tpu.memory_space<smem>>, %arg2: memref<64x128xf32, #tpu.memory_space<any>>, %arg3: memref<16x128xf32, #tpu.memory_space<vmem>>, %arg4: memref<16x128xf32, #tpu.memory_space<vmem>>, %arg5: memref<2x!tpu.dma_semaphore, #tpu.memory_space<semaphore_mem>>) attributes {dimension_semantics = [#tpu.dimension_semantics<parallel>], iteration_bounds = array<i64: 1>, scalar_prefetch = 1 : i64, scratch_operands = 2 : i64, tpu.core_type = #tpu.core_type<tc>, window_params = [{}, {transform_indices = @transform_1, window_bounds = array<i64: 16, 128>}]} {
    %c16_i32 = arith.constant 16 : i32
    %0 = arith.muli %arg0, %c16_i32 : i32
    %c0_i32 = arith.constant 0 : i32
    %c8_i32 = arith.constant 8 : i32
    %1 = arith.addi %c0_i32, %c8_i32 : i32
    %c1_i32 = arith.constant 1 : i32
    scf.for %arg6 = %c0_i32 to %1 step %c1_i32  : i32 {
      %c0_i32_18 = arith.constant 0 : i32
      %13 = arith.addi %c0_i32_18, %arg6 : i32
      %14 = arith.addi %0, %13 : i32
      %15 = arith.index_cast %14 : i32 to index
      %16 = memref.load %arg1[%15] : memref<16xi32, #tpu.memory_space<smem>>
      %c0_i32_19 = arith.constant 0 : i32
      %c0_i32_20 = arith.constant 0 : i32
      %17 = tpu.memref_slice %arg2[%16, %c0_i32_20] : memref<64x128xf32, #tpu.memory_space<any>> -> memref<1x128xf32, #tpu.memory_space<any>>
      %c0_i32_21 = arith.constant 0 : i32
      %18 = tpu.memref_slice %arg4[%13, %c0_i32_21] : memref<16x128xf32, #tpu.memory_space<vmem>> -> memref<1x128xf32, #tpu.memory_space<vmem>>
      %19 = tpu.memref_slice %arg5[%c0_i32_19] : memref<2x!tpu.dma_semaphore, #tpu.memory_space<semaphore_mem>> -> memref<1x!tpu.dma_semaphore, #tpu.memory_space<semaphore_mem>>
      %20 = tpu.memref_squeeze %19 : memref<1x!tpu.dma_semaphore, #tpu.memory_space<semaphore_mem>> -> memref<!tpu.dma_semaphore, #tpu.memory_space<semaphore_mem>>
      tpu.enqueue_dma source(%17 : memref<1x128xf32, #tpu.memory_space<any>>) target(%18 : memref<1x128xf32, #tpu.memory_space<vmem>>) target_semaphore(%20 : memref<!tpu.dma_semaphore, #tpu.memory_space<semaphore_mem>>)
    }
    %c8_i32_0 = arith.constant 8 : i32
    %c0_i32_1 = arith.constant 0 : i32
    %c8_i32_2 = arith.constant 8 : i32
    %2 = arith.addi %c0_i32_1, %c8_i32_2 : i32
    %c1_i32_3 = arith.constant 1 : i32
    scf.for %arg6 = %c0_i32_1 to %2 step %c1_i32_3  : i32 {
      %c8_i32_18 = arith.constant 8 : i32
      %13 = arith.addi %c8_i32_18, %arg6 : i32
      %14 = arith.addi %0, %13 : i32
      %15 = arith.index_cast %14 : i32 to index
      %16 = memref.load %arg1[%15] : memref<16xi32, #tpu.memory_space<smem>>
      %c1_i32_19 = arith.constant 1 : i32
      %c0_i32_20 = arith.constant 0 : i32
      %17 = tpu.memref_slice %arg2[%16, %c0_i32_20] : memref<64x128xf32, #tpu.memory_space<any>> -> memref<1x128xf32, #tpu.memory_space<any>>
      %c0_i32_21 = arith.constant 0 : i32
      %18 = tpu.memref_slice %arg4[%13, %c0_i32_21] : memref<16x128xf32, #tpu.memory_space<vmem>> -> memref<1x128xf32, #tpu.memory_space<vmem>>
      %19 = tpu.memref_slice %arg5[%c1_i32_19] : memref<2x!tpu.dma_semaphore, #tpu.memory_space<semaphore_mem>> -> memref<1x!tpu.dma_semaphore, #tpu.memory_space<semaphore_mem>>
      %20 = tpu.memref_squeeze %19 : memref<1x!tpu.dma_semaphore, #tpu.memory_space<semaphore_mem>> -> memref<!tpu.dma_semaphore, #tpu.memory_space<semaphore_mem>>
      tpu.enqueue_dma source(%17 : memref<1x128xf32, #tpu.memory_space<any>>) target(%18 : memref<1x128xf32, #tpu.memory_space<vmem>>) target_semaphore(%20 : memref<!tpu.dma_semaphore, #tpu.memory_space<semaphore_mem>>)
    }
    %c8_i32_4 = arith.constant 8 : i32
    %c0_i32_5 = arith.constant 0 : i32
    %c8_i32_6 = arith.constant 8 : i32
    %3 = arith.addi %c0_i32_5, %c8_i32_6 : i32
    %c1_i32_7 = arith.constant 1 : i32
    scf.for %arg6 = %c0_i32_5 to %3 step %c1_i32_7  : i32 {
      %c0_i32_18 = arith.constant 0 : i32
      %c0_i32_19 = arith.constant 0 : i32
      %c0_i32_20 = arith.constant 0 : i32
      %13 = tpu.memref_slice %arg2[%c0_i32_19, %c0_i32_20] : memref<64x128xf32, #tpu.memory_space<any>> -> memref<1x128xf32, #tpu.memory_space<any>>
      %c0_i32_21 = arith.constant 0 : i32
      %c0_i32_22 = arith.constant 0 : i32
      %14 = tpu.memref_slice %arg4[%c0_i32_21, %c0_i32_22] : memref<16x128xf32, #tpu.memory_space<vmem>> -> memref<1x128xf32, #tpu.memory_space<vmem>>
      %15 = tpu.memref_slice %arg5[%c0_i32_18] : memref<2x!tpu.dma_semaphore, #tpu.memory_space<semaphore_mem>> -> memref<1x!tpu.dma_semaphore, #tpu.memory_space<semaphore_mem>>
      %16 = tpu.memref_squeeze %15 : memref<1x!tpu.dma_semaphore, #tpu.memory_space<semaphore_mem>> -> memref<!tpu.dma_semaphore, #tpu.memory_space<semaphore_mem>>
      tpu.wait_dma2 semaphore(%16 : memref<!tpu.dma_semaphore, #tpu.memory_space<semaphore_mem>>) src(%13 : memref<1x128xf32, #tpu.memory_space<any>>) dst(%14 : memref<1x128xf32, #tpu.memory_space<vmem>>)
    }
    %c0 = arith.constant 0 : index
    %c0_8 = arith.constant 0 : index
    %4 = vector.load %arg4[%c0, %c0_8] : memref<16x128xf32, #tpu.memory_space<vmem>>, vector<8x128xf32>
    %cst = arith.constant 11.3137083 : f32
    %5 = vector.broadcast %cst : f32 to vector<8x128xf32>
    %6 = arith.mulf %4, %5 : vector<8x128xf32>
    %c0_9 = arith.constant 0 : index
    %c0_10 = arith.constant 0 : index
    %7 = vector.load %arg3[%c0_9, %c0_10] : memref<16x128xf32, #tpu.memory_space<vmem>>, vector<8x128xf32>
    tpu.vector_store %arg3[%c0_9, %c0_10], %6 {strides = array<i32>} : memref<16x128xf32, #tpu.memory_space<vmem>>, vector<8x128xf32>,
    %c0_i32_11 = arith.constant 0 : i32
    %c8_i32_12 = arith.constant 8 : i32
    %8 = arith.addi %c0_i32_11, %c8_i32_12 : i32
    %c1_i32_13 = arith.constant 1 : i32
    scf.for %arg6 = %c0_i32_11 to %8 step %c1_i32_13  : i32 {
      %c1_i32_18 = arith.constant 1 : i32
      %c0_i32_19 = arith.constant 0 : i32
      %c0_i32_20 = arith.constant 0 : i32
      %13 = tpu.memref_slice %arg2[%c0_i32_19, %c0_i32_20] : memref<64x128xf32, #tpu.memory_space<any>> -> memref<1x128xf32, #tpu.memory_space<any>>
      %c0_i32_21 = arith.constant 0 : i32
      %c0_i32_22 = arith.constant 0 : i32
      %14 = tpu.memref_slice %arg4[%c0_i32_21, %c0_i32_22] : memref<16x128xf32, #tpu.memory_space<vmem>> -> memref<1x128xf32, #tpu.memory_space<vmem>>
      %15 = tpu.memref_slice %arg5[%c1_i32_18] : memref<2x!tpu.dma_semaphore, #tpu.memory_space<semaphore_mem>> -> memref<1x!tpu.dma_semaphore, #tpu.memory_space<semaphore_mem>>
      %16 = tpu.memref_squeeze %15 : memref<1x!tpu.dma_semaphore, #tpu.memory_space<semaphore_mem>> -> memref<!tpu.dma_semaphore, #tpu.memory_space<semaphore_mem>>
      tpu.wait_dma2 semaphore(%16 : memref<!tpu.dma_semaphore, #tpu.memory_space<semaphore_mem>>) src(%13 : memref<1x128xf32, #tpu.memory_space<any>>) dst(%14 : memref<1x128xf32, #tpu.memory_space<vmem>>)
    }
    %c8 = arith.constant 8 : index
    %c0_14 = arith.constant 0 : index
    %9 = vector.load %arg4[%c8, %c0_14] : memref<16x128xf32, #tpu.memory_space<vmem>>, vector<8x128xf32>
    %cst_15 = arith.constant 11.3137083 : f32
    %10 = vector.broadcast %cst_15 : f32 to vector<8x128xf32>
    %11 = arith.mulf %9, %10 : vector<8x128xf32>
    %c8_16 = arith.constant 8 : index
    %c0_17 = arith.constant 0 : index
    %12 = vector.load %arg3[%c8_16, %c0_17] : memref<16x128xf32, #tpu.memory_space<vmem>>, vector<8x128xf32>
    tpu.vector_store %arg3[%c8_16, %c0_17], %11 {strides = array<i32>} : memref<16x128xf32, #tpu.memory_space<vmem>>, vector<8x128xf32>,
    return
  }
  func.func @transform_1(%arg0: i32, %arg1: memref<16xi32, #tpu.memory_space<smem>>) -> (i32, i32) {
    %c0_i32 = arith.constant 0 : i32
    %c0_i32_0 = arith.constant 0 : i32
    return %arg0, %c0_i32 : i32, i32
  }
}

</mosaic_0001>

<llo_original>
// kernel: tpu_custom_call.1
$region0: #{tpu_custom_call.1}
  #allocation0 [shape = 'u32[]', space=smem, size = 0x4, offset = 0x4, fixed_abs, tag = 'smem constant byte address 0x4 - core index']
  #allocation1 [shape = 'u32[144,128]{1,0:T(1,128)}', space=vmem, size = 0x12000, scoped, tag = 'internal scratch']
  #allocation2 [shape = 'f32[16,128]{1,0:T(8,128)}', space=vmem, size = 0x2000, scoped, tag = 'scratch operand']
  #allocation3 [shape = 's32[2]{0}', space=sflag, size = 0x8, scoped, tag = 'scratch operand']
  #allocation4 [shape = 's32[1]{0}', space=sflag, size = 0x4, scoped, tag = 'scoped memory for tpu_custom_call.1']
  #allocation5 [shape = 'u8[512]{0}', space=smem, size = 0x200, scoped, tag = 'prefetched SMEM operand 0']
  #allocation8 [shape = 's32[]', space=sflag, size = 0x4, offset = 0, fixed_abs, tag = 'sflag constant byte address 0x0 - dummy sync flag']
  #allocation9 [shape = 's32[]', space=sflag, size = 0x4, offset = 0, fixed_abs, tag = 'sflag constant byte address 0x0 - dummy sync flag']
  #allocation10 [shape = 'u32[]', space=smem, size = 0x4, offset = 0x44, fixed_abs, tag = 'smem constant byte address 0x44 - assertion arg 0']
  #allocation11 [shape = 'u32[]', space=smem, size = 0x4, offset = 0x48, fixed_abs, tag = 'smem constant byte address 0x48 - assertion arg 1']
  #allocation12 [shape = 's32[]', space=sflag, size = 0x4, offset = 0, fixed_abs, tag = 'sflag constant byte address 0x0 - dummy sync flag']
  #allocation13 [shape = 's32[]', space=sflag, size = 0x4, offset = 0, fixed_abs, tag = 'sflag constant byte address 0x0 - dummy sync flag']
  %s0 = inlined_call_operand.hbm [shape: s32[16], index: 0, kind: input, shape index: {}]
  %s1 = inlined_call_operand.hbm [shape: f32[64,128], index: 1, kind: input, shape index: {}]
  %s2 = inlined_call_operand.hbm [shape: f32[16,128], index: 2, kind: output, shape index: {}]
  %s3 = sld [smem:[#allocation0]]
  $region46: #{tpu_custom_call.1} parent=0
    _
  %s5 = ssub.s32 1, %s3
  %s6 = scalar_select 0, %s5, %s3
  %8 = dma.hbm_to_smem %s0, 16, [#allocation5], [#allocation4]
  %9 = dma.done [#allocation4], 16
  %10 = sfence
  $region1: #{tpu_custom_call.1} parent=0
    #allocation6 [shape = 'u8[8192]{0}', space=vmem, size = 0x2000, scoped, tag = 'output window, operand 0, single buffered']
    #allocation7 [shape = 's32[1]{0}', space=sflag, size = 0x4, scoped, tag = 'scoped memory for tpu_custom_call.1']
    %11 = vsyncpa [#allocation7], 0
    %s12 = smul.u32 0, 16
    loop: start=0, step=1, limit=8
    $region2: #{tpu_custom_call.1} parent=1 // loop_pre_header
      _
    $region3: #{tpu_custom_call.1} parent=1 // loop_header
      %s14 = sphi 0, %s18
      %p15 = scmp.ge.s32.totalorder %s14, 8
    $region4: #{tpu_custom_call.1} parent=1 // loop_header_branch
      %17 = sbr.rel (%p15) target = $region8
    $region5: #{tpu_custom_call.1} parent=1 // loop_body
      %s19 = sadd.s32 %s12, %s14
      %s20 = sld [smem:[#allocation5 + %s19]]
      %s21 = smul.addr %s20, 16
      %s22 = scalar_lea.hbm %s1, %s21
      %s23 = scalar_lea.vmem [#allocation2], %s14
      // Predicated region
      $region9: #{tpu_custom_call.1} parent=5 // pred_check
        _
      $region10: #{tpu_custom_call.1} parent=5 // pred_check_branch
        %25 = sbr.rel target = $region12
      $region11: #{tpu_custom_call.1} parent=5 // pred_region
        %26 = sst [smem:[#allocation10]] [#allocation9]
        %27 = sst [smem:[#allocation11]] [#allocation8]
      $region12: #{tpu_custom_call.1} parent=5 // pred_fallthru
        _
      %29 = shalt.err (0)
      %s31 = sshll.u32 %s23, 4
      %s32 = int_to_ptr.vmem [resolvable:$true] %s31
      %34 = dma.hbm_to_vmem [thread:$0]  %s22, 16, %s32, [#allocation3]
    $region6: #{tpu_custom_call.1} parent=1 // loop_footer
      %s18 = sadd.s32 1, %s14
    $region7: #{tpu_custom_call.1} parent=1 // loop_footer_branch
      %13 = sbr.rel target = $region3
    $region8: #{tpu_custom_call.1} parent=1 // loop_exit
      _
    loop: start=0, step=1, limit=8
    $region13: #{tpu_custom_call.1} parent=1 // loop_pre_header
      _
    $region14: #{tpu_custom_call.1} parent=1 // loop_header
      %s36 = sphi 0, %s40
      %p37 = scmp.ge.s32.totalorder %s36, 8
    $region15: #{tpu_custom_call.1} parent=1 // loop_header_branch
      %39 = sbr.rel (%p37) target = $region19
    $region16: #{tpu_custom_call.1} parent=1 // loop_body
      %s41 = sadd.s32 %s36, 8
      %s42 = sadd.s32 %s12, %s41
      %s43 = sld [smem:[#allocation5 + %s42]]
      %s44 = smul.addr %s43, 16
      %s45 = scalar_lea.hbm %s1, %s44
      %s46 = scalar_lea.vmem [#allocation2], %s41
      %s47 = scalar_lea.sflag [#allocation3], 1
      // Predicated region
      $region20: #{tpu_custom_call.1} parent=16 // pred_check
        _
      $region21: #{tpu_custom_call.1} parent=16 // pred_check_branch
        %49 = sbr.rel target = $region23
      $region22: #{tpu_custom_call.1} parent=16 // pred_region
        %50 = sst [smem:[#allocation10]] [#allocation13]
        %51 = sst [smem:[#allocation11]] [#allocation12]
      $region23: #{tpu_custom_call.1} parent=16 // pred_fallthru
        _
      %53 = shalt.err (0)
      %s55 = sshll.u32 %s46, 4
      %s56 = int_to_ptr.vmem [resolvable:$true] %s55
      %58 = dma.hbm_to_vmem [thread:$0]  %s45, 16, %s56, %s47
    $region17: #{tpu_custom_call.1} parent=1 // loop_footer
      %s40 = sadd.s32 1, %s36
    $region18: #{tpu_custom_call.1} parent=1 // loop_footer_branch
      %35 = sbr.rel target = $region14
    $region19: #{tpu_custom_call.1} parent=1 // loop_exit
      _
    loop: start=0, step=1, limit=8
    $region24: #{tpu_custom_call.1} parent=1 // loop_pre_header
      _
    $region25: #{tpu_custom_call.1} parent=1 // loop_header
      %s60 = sphi 0, %s64
      %p61 = scmp.ge.s32.totalorder %s60, 8
    $region26: #{tpu_custom_call.1} parent=1 // loop_header_branch
      %63 = sbr.rel (%p61) target = $region30
    $region27: #{tpu_custom_call.1} parent=1 // loop_body
      %s65 = smul.u32 1, 1
      %s66 = sshll.u32 %s65, 4
      %67 = dma.done [#allocation3], %s66
    $region28: #{tpu_custom_call.1} parent=1 // loop_footer
      %s64 = sadd.s32 1, %s60
    $region29: #{tpu_custom_call.1} parent=1 // loop_footer_branch
      %59 = sbr.rel target = $region25
    $region30: #{tpu_custom_call.1} parent=1 // loop_exit
      _
    %v68 = vld [vmem:[#allocation2] sm:$0xff]
    %v69 = vmul.f32 %v68, 11.313708
    %70 = vst [vmem:[#allocation6] sm:$0xff] %v69
    loop: start=0, step=1, limit=8
    $region31: #{tpu_custom_call.1} parent=1 // loop_pre_header
      _
    $region32: #{tpu_custom_call.1} parent=1 // loop_header
      %s72 = sphi 0, %s76
      %p73 = scmp.ge.s32.totalorder %s72, 8
    $region33: #{tpu_custom_call.1} parent=1 // loop_header_branch
      %75 = sbr.rel (%p73) target = $region37
    $region34: #{tpu_custom_call.1} parent=1 // loop_body
      %s77 = scalar_lea.sflag [#allocation3], 1
      %s78 = smul.u32 1, 1
      %s79 = sshll.u32 %s78, 4
      %80 = dma.done %s77, %s79
    $region35: #{tpu_custom_call.1} parent=1 // loop_footer
      %s76 = sadd.s32 1, %s72
    $region36: #{tpu_custom_call.1} parent=1 // loop_footer_branch
      %71 = sbr.rel target = $region32
    $region37: #{tpu_custom_call.1} parent=1 // loop_exit
      _
    %v81 = vld [vmem:[#allocation2 + $0x8] sm:$0xff]
    %v82 = vmul.f32 %v81, 11.313708
    %83 = vst [vmem:[#allocation6 + $0x8] sm:$0xff] %v82
    // Predicated region
    $region38: #{tpu_custom_call.1} parent=1 // pred_check
      _
    $region39: #{tpu_custom_call.1} parent=1 // pred_check_branch
      %85 = sbr.rel (0) target = $region41
    $region40: #{tpu_custom_call.1} parent=1 // pred_region
      %s87 = ssub.s32 256, 256
      %88 = vsyncadd [#allocation7], %s87
      %s89 = sshll.u32 [#allocation6], 4
      %s90 = int_to_ptr.vmem [resolvable:$true] %s89
      %95 = dma.vmem_to_hbm [thread:$0]  %s90, 256, %s2, [#allocation7], 128, 128, 8
    $region41: #{tpu_custom_call.1} parent=1 // pred_fallthru
      _
    // Predicated region
    $region42: #{tpu_custom_call.1} parent=1 // pred_check
      _
    $region43: #{tpu_custom_call.1} parent=1 // pred_check_branch
      %97 = sbr.rel (0) target = $region45
    $region44: #{tpu_custom_call.1} parent=1 // pred_region
      %98 = dma.done [#allocation7], 256
    $region45: #{tpu_custom_call.1} parent=1 // pred_fallthru
      _
    %99 = vsyncpa [#allocation7], 1
  %100 = vsyncmov [#allocation3]
  %s101 = vpop.sfrf %100
  %p102 = scmp.eq.s32.totalorder %s101, 0
  %p103 = pneg %p102
  %105 = shalt.err (%p103)
  %s106 = scalar_lea.sflag [#allocation3], 1
  %107 = vsyncmov %s106
  %s108 = vpop.sfrf %107
  %p109 = scmp.eq.s32.totalorder %s108, 0
  %p110 = pneg %p109
  %112 = shalt.err (%p110)

</llo_original>
